<compile_context>
chip_gen: v5e
topology: v5e:2x2
jax: 0.10.0
libtpu: 0.0.40
codegen_flags: <defaults>
</compile_context>

<pallas_src>
import functools
import math

import jax
import jax.numpy as jnp
from jax import lax
from jax.experimental import pallas as pl
from jax.experimental.pallas import tpu as pltpu


def _crfiqa_kernel(feat_ref, kern_ref, invk_ref, label_ref, qs_ref,
                   thetas_ref, lossrow_ref,
                   featn_ref, m_acc, l_acc, ccs_acc, nn_acc,
                   *, s, cos_m, sin_m, alpha, beta, tile_c):
    c = pl.program_id(1)
    nc = pl.num_programs(1)

    # ---- init per batch tile (first class tile) --------------------------------
    @pl.when(c == 0)
    def _init():
        f = feat_ref[...]                                         # (TB, D) f32
        inv = lax.rsqrt(jnp.sum(f * f, axis=1, keepdims=True))    # EUP rsqrt
        featn_ref[...] = (f * inv).astype(jnp.bfloat16)           # MXU operand
        m_acc[...] = jnp.full_like(m_acc, -jnp.inf)
        l_acc[...] = jnp.zeros_like(l_acc)
        ccs_acc[...] = jnp.zeros_like(ccs_acc)
        nn_acc[...] = jnp.full_like(nn_acc, -jnp.inf)

    # ---- cos_theta tile: bf16 MXU matmul, f32 acc, column norm folded in -------
    cos = jnp.dot(featn_ref[...], kern_ref[...],
                  preferred_element_type=jnp.float32)             # (TB, TC)
    cos = jnp.clip(cos * invk_ref[...], -1.0, 1.0)

    tb, tc = cos.shape
    label = label_ref[...]                                        # (TB, 1) i32
    class_ids = lax.broadcasted_iota(jnp.int32, (tb, tc), 1) + c * tile_c
    onehot = class_ids == label                                   # (TB, TC) bool

    # target cosine (ccs) and running max-negative (nnccs)
    ccs_tile = jnp.sum(jnp.where(onehot, cos, 0.0), axis=1, keepdims=True)
    ccs_acc[...] = ccs_acc[...] + ccs_tile
    nn_acc[...] = jnp.maximum(
        nn_acc[...],
        jnp.max(jnp.where(onehot, -1e-12, cos), axis=1, keepdims=True))

    # ArcFace margin only for the target column:
    #   cos(acos(x) + m) = x*cos(m) - sqrt(1 - x^2)*sin(m)        (O(B) work)
    marg = (ccs_tile * cos_m
            - jnp.sqrt(jnp.maximum(1.0 - ccs_tile * ccs_tile, 0.0)) * sin_m) * s
    thetas = jnp.where(onehot, marg, cos * s)
    thetas_ref[...] = thetas

    # online logsumexp for the cross-entropy
    m_prev = m_acc[...]
    m_new = jnp.maximum(m_prev, jnp.max(thetas, axis=1, keepdims=True))
    l_acc[...] = (l_acc[...] * jnp.exp(m_prev - m_new)
                  + jnp.sum(jnp.exp(thetas - m_new), axis=1, keepdims=True))
    m_acc[...] = m_new

    # ---- finalize per batch tile (last class tile) ------------------------------
    @pl.when(c == nc - 1)
    def _finalize():
        ccs = ccs_acc[...]                                        # (TB, 1)
        nn = nn_acc[...]                                          # (TB, 1)
        tgt = (ccs * cos_m
               - jnp.sqrt(jnp.maximum(1.0 - ccs * ccs, 0.0)) * sin_m) * s
        lse = m_acc[...] + jnp.log(l_acc[...])
        ce_row = lse - tgt                                        # CE per row

        # SmoothL1Loss(ccs / nnccs, qs, beta)
        d = ccs / nn - qs_ref[...]
        ad = jnp.abs(d)
        sl1 = jnp.where(ad < beta, (0.5 / beta) * d * d, ad - 0.5 * beta)

        lossrow_ref[...] = ce_row + alpha * sl1                   # (TB, 1)


def crfiqa_loss(features, qs, label, metric_kernel, *,
                s=64.0, m=0.5, alpha=10.0, tile_b=8, tile_c=128):
    features = features.astype(jnp.float32)
    metric_kernel = metric_kernel.astype(jnp.float32)
    qs = qs.astype(jnp.float32)

    B, D = features.shape
    C = metric_kernel.shape[1]
    if B % tile_b != 0:
        tile_b = B
    if C % tile_c != 0:
        tile_c = C
    nb, nc = B // tile_b, C // tile_c

    label2d = label.reshape(B, 1).astype(jnp.int32)

    # Column inverse L2-norms precomputed once (tiny) and folded into the matmul
    # output inside the kernel -> no normalized (D, C) weight copy is ever made.
    inv_knorm = lax.rsqrt(
        jnp.sum(metric_kernel * metric_kernel, axis=0, keepdims=True))  # (1, C)
    kern_bf16 = metric_kernel.astype(jnp.bfloat16)  # halve HBM weight traffic

    kfn = functools.partial(
        _crfiqa_kernel, s=float(s), cos_m=math.cos(m), sin_m=math.sin(m),
        alpha=float(alpha), beta=0.5, tile_c=tile_c)

    bytes_accessed = (B * D * 4 + D * C * 2 + C * 4 + B * 4 + B * 4
                      + B * C * 4 + B * 4)

    thetas, loss_rows = pl.pallas_call(
        kfn,
        out_shape=(jax.ShapeDtypeStruct((B, C), jnp.float32),
                   jax.ShapeDtypeStruct((B, 1), jnp.float32)),
        grid_spec=pltpu.PrefetchScalarGridSpec(
            num_scalar_prefetch=0,
            grid=(nb, nc),
            in_specs=[
                pl.BlockSpec((tile_b, D), lambda b, c: (b, 0)),    # features
                pl.BlockSpec((D, tile_c), lambda b, c: (0, c)),    # weight (bf16)
                pl.BlockSpec((1, tile_c), lambda b, c: (0, c)),    # 1/||w_col||
                pl.BlockSpec((tile_b, 1), lambda b, c: (b, 0)),    # labels
                pl.BlockSpec((tile_b, 1), lambda b, c: (b, 0)),    # qs
            ],
            out_specs=[
                pl.BlockSpec((tile_b, tile_c), lambda b, c: (b, c)),  # thetas
                pl.BlockSpec((tile_b, 1), lambda b, c: (b, 0)),       # per-row loss
            ],
            scratch_shapes=[
                pltpu.VMEM((tile_b, D), jnp.bfloat16),   # normalized features
                pltpu.VMEM((tile_b, 1), jnp.float32),    # running row-max
                pltpu.VMEM((tile_b, 1), jnp.float32),    # running sum-exp
                pltpu.VMEM((tile_b, 1), jnp.float32),    # ccs (target cosine)
                pltpu.VMEM((tile_b, 1), jnp.float32),    # nnccs (max negative)
            ]),
        compiler_params=pltpu.CompilerParams(
            dimension_semantics=("parallel", "arbitrary"),
            vmem_limit_bytes=32 * 1024 * 1024),
        cost_estimate=pl.CostEstimate(
            flops=int(2 * B * D * C),
            transcendentals=int(B * C),
            bytes_accessed=int(bytes_accessed)),
    )(features, kern_bf16, inv_knorm, label2d, qs)

    loss = jnp.mean(loss_rows)   # mean(CE_row + alpha*SmoothL1_row)
    return loss, thetas


def _reference(features, qs, label, metric_kernel, *, s=64.0, m=0.5, alpha=10.0):
    """Pure-JAX f32 mirror of the PyTorch forward (all labels assumed valid)."""
    emb = features / jnp.linalg.norm(features, axis=1, keepdims=True)
    kn = metric_kernel / jnp.linalg.norm(metric_kernel, axis=0, keepdims=True)
    cos = jnp.clip(jnp.dot(emb, kn, precision=lax.Precision.HIGHEST), -1.0, 1.0)
    B, C = cos.shape
    onehot = jax.nn.one_hot(label, C, dtype=jnp.float32)
    ccs = jnp.sum(cos * onehot, axis=1, keepdims=True)
    nnccs = jnp.max(jnp.where(onehot > 0, -1e-12, cos), axis=1, keepdims=True)
    theta = jnp.arccos(cos) + m * onehot
    thetas = jnp.cos(theta) * s
    logp = jax.nn.log_softmax(thetas, axis=1)
    ce = -jnp.mean(jnp.sum(logp * onehot, axis=1))
    d = ccs / nnccs - qs
    sl1 = jnp.where(jnp.abs(d) < 0.5, 0.5 * d * d / 0.5, jnp.abs(d) - 0.25)
    return ce + alpha * jnp.mean(sl1), thetas


if __name__ == "__main__":
    # batch, in_features, out_features (num classes) -- small but tile-aligned
    B, D, C = 16, 128, 512
    key = jax.random.PRNGKey(0)
    k1, k2, k3, k4 = jax.random.split(key, 4)

    features = jax.random.normal(k1, (B, D), jnp.float32)
    qs = jax.random.uniform(k2, (B, 1), jnp.float32)
    label = jax.random.randint(k3, (B,), 0, C, jnp.int32)          # all valid
    metric_kernel = 0.01 * jax.random.normal(k4, (D, C), jnp.float32)

    fn = jax.jit(functools.partial(crfiqa_loss, tile_b=8, tile_c=128))
    loss, thetas = fn(features, qs, label, metric_kernel)
    jax.block_until_ready((loss, thetas))

    ref_loss, ref_thetas = _reference(features, qs, label, metric_kernel)
    # kernel uses bf16 MXU inputs (single pass) vs an f32 HIGHEST reference,
    # so tolerances account for bf16 rounding amplified by s=64.
    assert jnp.allclose(thetas, ref_thetas, atol=0.25, rtol=2e-2), "thetas mismatch"
    assert jnp.allclose(loss, ref_loss, atol=0.5, rtol=2e-2), "loss mismatch"

    print("KERNEL_OK")
</pallas_src>

<mosaic_0001>
module attributes {stable_mosaic.version = 11 : i64} {
  func.func @_crfiqa_kernel(%arg0: i32, %arg1: i32, %arg2: memref<8x128xf32, #tpu.memory_space<vmem>>, %arg3: memref<128x128xbf16, #tpu.memory_space<vmem>>, %arg4: memref<1x128xf32, #tpu.memory_space<vmem>>, %arg5: memref<8x1xi32, #tpu.memory_space<vmem>>, %arg6: memref<8x1xf32, #tpu.memory_space<vmem>>, %arg7: memref<8x128xf32, #tpu.memory_space<vmem>>, %arg8: memref<8x1xf32, #tpu.memory_space<vmem>>, %arg9: memref<8x128xbf16, #tpu.memory_space<vmem>>, %arg10: memref<8x1xf32, #tpu.memory_space<vmem>>, %arg11: memref<8x1xf32, #tpu.memory_space<vmem>>, %arg12: memref<8x1xf32, #tpu.memory_space<vmem>>, %arg13: memref<8x1xf32, #tpu.memory_space<vmem>>) attributes {dimension_semantics = [#tpu.dimension_semantics<parallel>, #tpu.dimension_semantics<arbitrary>], iteration_bounds = array<i64: 2, 4>, scalar_prefetch = 0 : i64, scratch_operands = 5 : i64, tpu.core_type = #tpu.core_type<tc>, window_params = [{transform_indices = @transform_0, window_bounds = array<i64: 8, 128>}, {transform_indices = @transform_1, window_bounds = array<i64: 128, 128>}, {transform_indices = @transform_2, window_bounds = array<i64: 1, 128>}, {transform_indices = @transform_3, window_bounds = array<i64: 8, 1>}, {transform_indices = @transform_4, window_bounds = array<i64: 8, 1>}, {transform_indices = @transform_5, window_bounds = array<i64: 8, 128>}, {transform_indices = @transform_6, window_bounds = array<i64: 8, 1>}]} {
    %c0_i32 = arith.constant 0 : i32
    %0 = arith.cmpi eq, %arg1, %c0_i32 : i32
    %1 = arith.extui %0 : i1 to i32
    %c0_i32_0 = arith.constant 0 : i32
    %2 = arith.cmpi ne, %1, %c0_i32_0 : i32
    scf.if %2 {
      %c0_41 = arith.constant 0 : index
      %c0_42 = arith.constant 0 : index
      %72 = vector.load %arg2[%c0_41, %c0_42] : memref<8x128xf32, #tpu.memory_space<vmem>>, vector<8x128xf32>
      %73 = arith.mulf %72, %72 : vector<8x128xf32>
      %cst_43 = arith.constant dense<0.000000e+00> : vector<8xf32>
      %74 = vector.multi_reduction <add>, %73, %cst_43 [1] : vector<8x128xf32> to vector<8xf32>
      %75 = vector.shape_cast %74 : vector<8xf32> to vector<8x1xf32>
      %76 = math.rsqrt %75 : vector<8x1xf32>
      %77 = vector.broadcast %76 : vector<8x1xf32> to vector<8x128xf32>
      %78 = arith.mulf %72, %77 : vector<8x128xf32>
      %79 = arith.truncf %78 : vector<8x128xf32> to vector<8x128xbf16>
      %c0_44 = arith.constant 0 : index
      %c0_45 = arith.constant 0 : index
      %80 = vector.load %arg9[%c0_44, %c0_45] : memref<8x128xbf16, #tpu.memory_space<vmem>>, vector<8x128xbf16>
      tpu.vector_store %arg9[%c0_44, %c0_45], %79 {strides = array<i32>} : memref<8x128xbf16, #tpu.memory_space<vmem>>, vector<8x128xbf16>,
      %cst_46 = arith.constant 0xFF800000 : f32
      %81 = vector.broadcast %cst_46 : f32 to vector<8x1xf32>
      %c0_47 = arith.constant 0 : index
      %c0_48 = arith.constant 0 : index
      %82 = vector.load %arg10[%c0_47, %c0_48] : memref<8x1xf32, #tpu.memory_space<vmem>>, vector<8x1xf32>
      tpu.vector_store %arg10[%c0_47, %c0_48], %81 {strides = array<i32>} : memref<8x1xf32, #tpu.memory_space<vmem>>, vector<8x1xf32>,
      %cst_49 = arith.constant 0.000000e+00 : f32
      %83 = vector.broadcast %cst_49 : f32 to vector<8x1xf32>
      %c0_50 = arith.constant 0 : index
      %c0_51 = arith.constant 0 : index
      %84 = vector.load %arg11[%c0_50, %c0_51] : memref<8x1xf32, #tpu.memory_space<vmem>>, vector<8x1xf32>
      tpu.vector_store %arg11[%c0_50, %c0_51], %83 {strides = array<i32>} : memref<8x1xf32, #tpu.memory_space<vmem>>, vector<8x1xf32>,
      %cst_52 = arith.constant 0.000000e+00 : f32
      %85 = vector.broadcast %cst_52 : f32 to vector<8x1xf32>
      %c0_53 = arith.constant 0 : index
      %c0_54 = arith.constant 0 : index
      %86 = vector.load %arg12[%c0_53, %c0_54] : memref<8x1xf32, #tpu.memory_space<vmem>>, vector<8x1xf32>
      tpu.vector_store %arg12[%c0_53, %c0_54], %85 {strides = array<i32>} : memref<8x1xf32, #tpu.memory_space<vmem>>, vector<8x1xf32>,
      %cst_55 = arith.constant 0xFF800000 : f32
      %87 = vector.broadcast %cst_55 : f32 to vector<8x1xf32>
      %c0_56 = arith.constant 0 : index
      %c0_57 = arith.constant 0 : index
      %88 = vector.load %arg13[%c0_56, %c0_57] : memref<8x1xf32, #tpu.memory_space<vmem>>, vector<8x1xf32>
      tpu.vector_store %arg13[%c0_56, %c0_57], %87 {strides = array<i32>} : memref<8x1xf32, #tpu.memory_space<vmem>>, vector<8x1xf32>,
    } else {
    }
    %c0 = arith.constant 0 : index
    %c0_1 = arith.constant 0 : index
    %3 = vector.load %arg9[%c0, %c0_1] : memref<8x128xbf16, #tpu.memory_space<vmem>>, vector<8x128xbf16>
    %c0_2 = arith.constant 0 : index
    %c0_3 = arith.constant 0 : index
    %4 = vector.load %arg3[%c0_2, %c0_3] : memref<128x128xbf16, #tpu.memory_space<vmem>>, vector<128x128xbf16>
    %cst = arith.constant dense<0.000000e+00> : vector<8x128xf32>
    %5 = tpu.matmul %3, %4, %cst {dimension_numbers = #tpu.dot_dimension_numbers<[1], [0], [0], [1], [0, 0, 1, 1], [], []>} : vector<8x128xbf16>, vector<128x128xbf16>, vector<8x128xf32> -> vector<8x128xf32>
    %c0_4 = arith.constant 0 : index
    %c0_5 = arith.constant 0 : index
    %6 = vector.load %arg4[%c0_4, %c0_5] : memref<1x128xf32, #tpu.memory_space<vmem>>, vector<1x128xf32>
    %7 = vector.broadcast %6 : vector<1x128xf32> to vector<8x128xf32>
    %8 = arith.mulf %5, %7 : vector<8x128xf32>
    %cst_6 = arith.constant -1.000000e+00 : f32
    %cst_7 = arith.constant 1.000000e+00 : f32
    %9 = vector.broadcast %cst_6 : f32 to vector<8x128xf32>
    %10 = arith.maximumf %9, %8 : vector<8x128xf32>
    %11 = vector.broadcast %cst_7 : f32 to vector<8x128xf32>
    %12 = arith.minimumf %11, %10 : vector<8x128xf32>
    %c0_8 = arith.constant 0 : index
    %c0_9 = arith.constant 0 : index
    %13 = vector.load %arg5[%c0_8, %c0_9] : memref<8x1xi32, #tpu.memory_space<vmem>>, vector<8x1xi32>
    %14 = tpu.iota {dimensions = array<i32: 1>} : vector<8x128xi32>
    %c128_i32 = arith.constant 128 : i32
    %15 = arith.muli %arg1, %c128_i32 : i32
    %16 = vector.broadcast %15 : i32 to vector<8x128xi32>
    %17 = arith.addi %14, %16 : vector<8x128xi32>
    %18 = vector.broadcast %13 : vector<8x1xi32> to vector<8x128xi32>
    %19 = arith.cmpi eq, %17, %18 : vector<8x128xi32>
    %cst_10 = arith.constant 0.000000e+00 : f32
    %20 = vector.broadcast %cst_10 : f32 to vector<8x128xf32>
    %21 = arith.select %19, %12, %20 : vector<8x128xi1>, vector<8x128xf32>
    %cst_11 = arith.constant dense<0.000000e+00> : vector<8xf32>
    %22 = vector.multi_reduction <add>, %21, %cst_11 [1] : vector<8x128xf32> to vector<8xf32>
    %23 = vector.shape_cast %22 : vector<8xf32> to vector<8x1xf32>
    %c0_12 = arith.constant 0 : index
    %c0_13 = arith.constant 0 : index
    %24 = vector.load %arg12[%c0_12, %c0_13] : memref<8x1xf32, #tpu.memory_space<vmem>>, vector<8x1xf32>
    %25 = arith.addf %24, %23 : vector<8x1xf32>
    %c0_14 = arith.constant 0 : index
    %c0_15 = arith.constant 0 : index
    %26 = vector.load %arg12[%c0_14, %c0_15] : memref<8x1xf32, #tpu.memory_space<vmem>>, vector<8x1xf32>
    tpu.vector_store %arg12[%c0_14, %c0_15], %25 {strides = array<i32>} : memref<8x1xf32, #tpu.memory_space<vmem>>, vector<8x1xf32>,
    %c0_16 = arith.constant 0 : index
    %c0_17 = arith.constant 0 : index
    %27 = vector.load %arg13[%c0_16, %c0_17] : memref<8x1xf32, #tpu.memory_space<vmem>>, vector<8x1xf32>
    %cst_18 = arith.constant -9.99999996E-13 : f32
    %28 = vector.broadcast %cst_18 : f32 to vector<8x128xf32>
    %29 = arith.select %19, %28, %12 : vector<8x128xi1>, vector<8x128xf32>
    %cst_19 = arith.constant dense<0xFF800000> : vector<8xf32>
    %30 = vector.multi_reduction <maximumf>, %29, %cst_19 [1] : vector<8x128xf32> to vector<8xf32>
    %31 = vector.shape_cast %30 : vector<8xf32> to vector<8x1xf32>
    %32 = arith.maximumf %27, %31 : vector<8x1xf32>
    %c0_20 = arith.constant 0 : index
    %c0_21 = arith.constant 0 : index
    %33 = vector.load %arg13[%c0_20, %c0_21] : memref<8x1xf32, #tpu.memory_space<vmem>>, vector<8x1xf32>
    tpu.vector_store %arg13[%c0_20, %c0_21], %32 {strides = array<i32>} : memref<8x1xf32, #tpu.memory_space<vmem>>, vector<8x1xf32>,
    %cst_22 = arith.constant 0.87758255 : f32
    %34 = vector.broadcast %cst_22 : f32 to vector<8x1xf32>
    %35 = arith.mulf %23, %34 : vector<8x1xf32>
    %36 = arith.mulf %23, %23 : vector<8x1xf32>
    %cst_23 = arith.constant 1.000000e+00 : f32
    %37 = vector.broadcast %cst_23 : f32 to vector<8x1xf32>
    %38 = arith.subf %37, %36 : vector<8x1xf32>
    %cst_24 = arith.constant 0.000000e+00 : f32
    %39 = vector.broadcast %cst_24 : f32 to vector<8x1xf32>
    %40 = arith.maximumf %38, %39 : vector<8x1xf32>
    %41 = math.sqrt %40 : vector<8x1xf32>
    %cst_25 = arith.constant 0.47942555 : f32
    %42 = vector.broadcast %cst_25 : f32 to vector<8x1xf32>
    %43 = arith.mulf %41, %42 : vector<8x1xf32>
    %44 = arith.subf %35, %43 : vector<8x1xf32>
    %cst_26 = arith.constant 6.400000e+01 : f32
    %45 = vector.broadcast %cst_26 : f32 to vector<8x1xf32>
    %46 = arith.mulf %44, %45 : vector<8x1xf32>
    %cst_27 = arith.constant 6.400000e+01 : f32
    %47 = vector.broadcast %cst_27 : f32 to vector<8x128xf32>
    %48 = arith.mulf %12, %47 : vector<8x128xf32>
    %49 = vector.shape_cast %46 : vector<8x1xf32> to vector<8x1xf32>
    %50 = vector.broadcast %49 : vector<8x1xf32> to vector<8x128xf32>
    %51 = arith.select %19, %50, %48 : vector<8x128xi1>, vector<8x128xf32>
    %c0_28 = arith.constant 0 : index
    %c0_29 = arith.constant 0 : index
    %52 = vector.load %arg7[%c0_28, %c0_29] : memref<8x128xf32, #tpu.memory_space<vmem>>, vector<8x128xf32>
    tpu.vector_store %arg7[%c0_28, %c0_29], %51 {strides = array<i32>} : memref<8x128xf32, #tpu.memory_space<vmem>>, vector<8x128xf32>,
    %c0_30 = arith.constant 0 : index
    %c0_31 = arith.constant 0 : index
    %53 = vector.load %arg10[%c0_30, %c0_31] : memref<8x1xf32, #tpu.memory_space<vmem>>, vector<8x1xf32>
    %cst_32 = arith.constant dense<0xFF800000> : vector<8xf32>
    %54 = vector.multi_reduction <maximumf>, %51, %cst_32 [1] : vector<8x128xf32> to vector<8xf32>
    %55 = vector.shape_cast %54 : vector<8xf32> to vector<8x1xf32>
    %56 = arith.maximumf %53, %55 : vector<8x1xf32>
    %c0_33 = arith.constant 0 : index
    %c0_34 = arith.constant 0 : index
    %57 = vector.load %arg11[%c0_33, %c0_34] : memref<8x1xf32, #tpu.memory_space<vmem>>, vector<8x1xf32>
    %58 = arith.subf %53, %56 : vector<8x1xf32>
    %59 = math.exp %58 : vector<8x1xf32>
    %60 = arith.mulf %57, %59 : vector<8x1xf32>
    %61 = vector.broadcast %56 : vector<8x1xf32> to vector<8x128xf32>
    %62 = arith.subf %51, %61 : vector<8x128xf32>
    %63 = math.exp %62 : vector<8x128xf32>
    %cst_35 = arith.constant dense<0.000000e+00> : vector<8xf32>
    %64 = vector.multi_reduction <add>, %63, %cst_35 [1] : vector<8x128xf32> to vector<8xf32>
    %65 = vector.shape_cast %64 : vector<8xf32> to vector<8x1xf32>
    %66 = arith.addf %60, %65 : vector<8x1xf32>
    %c0_36 = arith.constant 0 : index
    %c0_37 = arith.constant 0 : index
    %67 = vector.load %arg11[%c0_36, %c0_37] : memref<8x1xf32, #tpu.memory_space<vmem>>, vector<8x1xf32>
    tpu.vector_store %arg11[%c0_36, %c0_37], %66 {strides = array<i32>} : memref<8x1xf32, #tpu.memory_space<vmem>>, vector<8x1xf32>,
    %c0_38 = arith.constant 0 : index
    %c0_39 = arith.constant 0 : index
    %68 = vector.load %arg10[%c0_38, %c0_39] : memref<8x1xf32, #tpu.memory_space<vmem>>, vector<8x1xf32>
    tpu.vector_store %arg10[%c0_38, %c0_39], %56 {strides = array<i32>} : memref<8x1xf32, #tpu.memory_space<vmem>>, vector<8x1xf32>,
    %c3_i32 = arith.constant 3 : i32
    %69 = arith.cmpi eq, %arg1, %c3_i32 : i32
    %70 = arith.extui %69 : i1 to i32
    %c0_i32_40 = arith.constant 0 : i32
    %71 = arith.cmpi ne, %70, %c0_i32_40 : i32
    scf.if %71 {
      %c0_41 = arith.constant 0 : index
      %c0_42 = arith.constant 0 : index
      %72 = vector.load %arg12[%c0_41, %c0_42] : memref<8x1xf32, #tpu.memory_space<vmem>>, vector<8x1xf32>
      %c0_43 = arith.constant 0 : index
      %c0_44 = arith.constant 0 : index
      %73 = vector.load %arg13[%c0_43, %c0_44] : memref<8x1xf32, #tpu.memory_space<vmem>>, vector<8x1xf32>
      %cst_45 = arith.constant 0.87758255 : f32
      %74 = vector.broadcast %cst_45 : f32 to vector<8x1xf32>
      %75 = arith.mulf %72, %74 : vector<8x1xf32>
      %76 = arith.mulf %72, %72 : vector<8x1xf32>
      %cst_46 = arith.constant 1.000000e+00 : f32
      %77 = vector.broadcast %cst_46 : f32 to vector<8x1xf32>
      %78 = arith.subf %77, %76 : vector<8x1xf32>
      %cst_47 = arith.constant 0.000000e+00 : f32
      %79 = vector.broadcast %cst_47 : f32 to vector<8x1xf32>
      %80 = arith.maximumf %78, %79 : vector<8x1xf32>
      %81 = math.sqrt %80 : vector<8x1xf32>
      %cst_48 = arith.constant 0.47942555 : f32
      %82 = vector.broadcast %cst_48 : f32 to vector<8x1xf32>
      %83 = arith.mulf %81, %82 : vector<8x1xf32>
      %84 = arith.subf %75, %83 : vector<8x1xf32>
      %cst_49 = arith.constant 6.400000e+01 : f32
      %85 = vector.broadcast %cst_49 : f32 to vector<8x1xf32>
      %86 = arith.mulf %84, %85 : vector<8x1xf32>
      %c0_50 = arith.constant 0 : index
      %c0_51 = arith.constant 0 : index
      %87 = vector.load %arg10[%c0_50, %c0_51] : memref<8x1xf32, #tpu.memory_space<vmem>>, vector<8x1xf32>
      %c0_52 = arith.constant 0 : index
      %c0_53 = arith.constant 0 : index
      %88 = vector.load %arg11[%c0_52, %c0_53] : memref<8x1xf32, #tpu.memory_space<vmem>>, vector<8x1xf32>
      %89 = math.log %88 : vector<8x1xf32>
      %90 = arith.addf %87, %89 : vector<8x1xf32>
      %91 = arith.subf %90, %86 : vector<8x1xf32>
      %92 = arith.divf %72, %73 : vector<8x1xf32>
      %c0_54 = arith.constant 0 : index
      %c0_55 = arith.constant 0 : index
      %93 = vector.load %arg6[%c0_54, %c0_55] : memref<8x1xf32, #tpu.memory_space<vmem>>, vector<8x1xf32>
      %94 = arith.subf %92, %93 : vector<8x1xf32>
      %95 = math.absf %94 : vector<8x1xf32>
      %cst_56 = arith.constant 5.000000e-01 : f32
      %96 = vector.broadcast %cst_56 : f32 to vector<8x1xf32>
      %97 = arith.cmpf olt, %95, %96 : vector<8x1xf32>
      %cst_57 = arith.constant 1.000000e+00 : f32
      %98 = vector.broadcast %cst_57 : f32 to vector<8x1xf32>
      %99 = arith.mulf %98, %94 : vector<8x1xf32>
      %100 = arith.mulf %99, %94 : vector<8x1xf32>
      %cst_58 = arith.constant 2.500000e-01 : f32
      %101 = vector.broadcast %cst_58 : f32 to vector<8x1xf32>
      %102 = arith.subf %95, %101 : vector<8x1xf32>
      %103 = arith.select %97, %100, %102 : vector<8x1xi1>, vector<8x1xf32>
      %cst_59 = arith.constant 1.000000e+01 : f32
      %104 = vector.broadcast %cst_59 : f32 to vector<8x1xf32>
      %105 = arith.mulf %104, %103 : vector<8x1xf32>
      %106 = arith.addf %91, %105 : vector<8x1xf32>
      %c0_60 = arith.constant 0 : index
      %c0_61 = arith.constant 0 : index
      %107 = vector.load %arg8[%c0_60, %c0_61] : memref<8x1xf32, #tpu.memory_space<vmem>>, vector<8x1xf32>
      tpu.vector_store %arg8[%c0_60, %c0_61], %106 {strides = array<i32>} : memref<8x1xf32, #tpu.memory_space<vmem>>, vector<8x1xf32>,
    } else {
    }
    return
  }
  func.func @transform_0(%arg0: i32, %arg1: i32) -> (i32, i32) {
    %c0_i32 = arith.constant 0 : i32
    %c0_i32_0 = arith.constant 0 : i32
    return %arg0, %c0_i32 : i32, i32
  }
  func.func @transform_1(%arg0: i32, %arg1: i32) -> (i32, i32) {
    %c0_i32 = arith.constant 0 : i32
    %c0_i32_0 = arith.constant 0 : i32
    return %c0_i32, %arg1 : i32, i32
  }
  func.func @transform_2(%arg0: i32, %arg1: i32) -> (i32, i32) {
    %c0_i32 = arith.constant 0 : i32
    %c0_i32_0 = arith.constant 0 : i32
    return %c0_i32, %arg1 : i32, i32
  }
  func.func @transform_3(%arg0: i32, %arg1: i32) -> (i32, i32) {
    %c0_i32 = arith.constant 0 : i32
    %c0_i32_0 = arith.constant 0 : i32
    return %arg0, %c0_i32 : i32, i32
  }
  func.func @transform_4(%arg0: i32, %arg1: i32) -> (i32, i32) {
    %c0_i32 = arith.constant 0 : i32
    %c0_i32_0 = arith.constant 0 : i32
    return %arg0, %c0_i32 : i32, i32
  }
  func.func @transform_5(%arg0: i32, %arg1: i32) -> (i32, i32) {
    %c0_i32 = arith.constant 0 : i32
    return %arg0, %arg1 : i32, i32
  }
  func.func @transform_6(%arg0: i32, %arg1: i32) -> (i32, i32) {
    %c0_i32 = arith.constant 0 : i32
    %c0_i32_0 = arith.constant 0 : i32
    return %arg0, %c0_i32 : i32, i32
  }
}

</mosaic_0001>

<llo_original>
// kernel: crfiqa_loss.1
$region0: #{crfiqa_loss.1}
  #allocation0 [shape = 'u32[]', space=smem, size = 0x4, offset = 0x4, fixed_abs, tag = 'smem constant byte address 0x4 - core index']
  #allocation1 [shape = 'u32[72,128]{1,0:T(1,128)}', space=vmem, size = 0x9000, scoped, tag = 'internal scratch']
  #allocation2 [shape = 'bf16[8,128]{1,0:T(8,128)(2,1)}', space=vmem, size = 0x800, scoped, tag = 'scratch operand']
  #allocation3 [shape = 'f32[8,1]{1,0:T(8,128)}', space=vmem, size = 0x1000, scoped, tag = 'scratch operand']
  #allocation4 [shape = 'f32[8,1]{1,0:T(8,128)}', space=vmem, size = 0x1000, scoped, tag = 'scratch operand']
  #allocation5 [shape = 'f32[8,1]{1,0:T(8,128)}', space=vmem, size = 0x1000, scoped, tag = 'scratch operand']
  #allocation6 [shape = 'f32[8,1]{1,0:T(8,128)}', space=vmem, size = 0x1000, scoped, tag = 'scratch operand']
  %s0 = inlined_call_operand.vmem [shape: f32[16,128], index: 0, kind: input, shape index: {}]
  %s1 = inlined_call_operand.vmem [shape: bf16[128,512], index: 1, kind: input, shape index: {}]
  %s2 = inlined_call_operand.vmem [shape: f32[1,512], index: 2, kind: input, shape index: {}]
  %s3 = inlined_call_operand.vmem [shape: s32[16,1], index: 3, kind: input, shape index: {}]
  %s4 = inlined_call_operand.vmem [shape: f32[16,1], index: 4, kind: input, shape index: {}]
  %s5 = inlined_call_operand.hbm [shape: f32[16,512], index: 5, kind: output, shape index: {0}]
  %s6 = inlined_call_operand.vmem [shape: f32[16,1], index: 6, kind: output, shape index: {1}]
  %7 = xla_tuple %s5, %s6
  %s8 = sld [smem:[#allocation0]]
  $region110: #{crfiqa_loss.1} parent=0
    _
  %s10 = ssub.s32 1, %s8
  %s11 = scalar_select 0, %s10, %s8
  $region1: #{crfiqa_loss.1} parent=0
    #allocation7 [shape = 'u8[65536]{0}', space=vmem, size = 0x10000, scoped, tag = 'input window, operand 1']
    #allocation8 [shape = 'u8[8192]{0}', space=vmem, size = 0x2000, scoped, tag = 'output window, operand 0']
    #allocation9 [shape = 's32[2]{0}', space=sflag, size = 0x8, scoped, tag = 'scoped memory for crfiqa_loss.1']
    %12 = vsyncpa [#allocation9], 0
    %s13 = scalar_lea.sflag [#allocation9], 1
    %14 = vsyncpa %s13, 0
    loop: start=0, step=1, limit=10
    $region2: #{crfiqa_loss.1} parent=1 // loop_pre_header
      _
    $region3: #{crfiqa_loss.1} parent=1 // loop_header
      %s16 = sphi 0, %s20
      %p17 = scmp.ge.s32.totalorder %s16, 10
      %s23 = sphi 0, %s35
      %s24 = sphi 0, %s31
      %s25 = sphi 0, %s23
      %s26 = sphi 0, %s24
      %s27 = sphi 0, %s25
      %s28 = sphi 0, %s26
      %s38 = sphi 0, %s40
      %s41 = sphi 0, %s38
      %s42 = sphi 0, %s41
      %s58 = sphi 0, %s42
      %s64 = sphi 0, %s66
      %s67 = sphi 0, %s64
      %s68 = sphi 0, %s67
      %s84 = sphi 0, %s68
      %s90 = sphi 0, %s92
      %s93 = sphi 0, %s90
      %s94 = sphi 0, %s93
      %s110 = sphi 0, %s94
      %s116 = sphi 0, %s118
      %s119 = sphi 0, %s116
      %s120 = sphi 0, %s119
      %s136 = sphi 0, %s120
      %s142 = sphi 0, %s144
      %s145 = sphi 0, %s142
      %s146 = sphi 0, %s145
      %s162 = sphi 0, %s146
      %s170 = sphi 0, %s172
      %s173 = sphi 0, %s170
      %s174 = sphi 0, %s173
      %s190 = sphi 0, %s174
      %s196 = sphi 0, %s198
      %s199 = sphi 0, %s196
      %s200 = sphi 0, %s199
      %s216 = sphi 0, %s200
    $region4: #{crfiqa_loss.1} parent=1 // loop_header_branch
      %19 = sbr.rel (%p17) target = $region8
    $region5: #{crfiqa_loss.1} parent=1 // loop_body
      %s21 = ssub.s32 %s16, 1
      %s22 = ssub.s32 %s16, 2
      %s29 = sadd.s32 1, %s24
      %p30 = scmp.ge.s32.totalorder %s29, 4
      %s31 = scalar_select %p30, 0, %s29
      %s32 = sadd.s32 1, %s23
      %s33 = scalar_select %p30, %s32, %s23
      %p34 = scmp.ge.s32.totalorder %s33, 2
      %s35 = scalar_select %p34, 0, %s33
      %s36 = ssub.s32 %s23, %s35
      %p37 = scmp.eq.s32.totalorder %s36, 0
      %s39 = sadd.s32 %s38, 1
      %s40 = scalar_select %p37, %s38, %s39
      %p43 = pneg %p37
      %p44 = scmp.eq.s32.totalorder %s16, 7
      %p45 = por %p43, %p44
      %p46 = scmp.ne.s32.totalorder %s38, %s41
      %p47 = scmp.eq.s32.totalorder %s16, 0
      %p48 = por %p46, %p47
      %p49 = scmp.ne.s32.totalorder %s38, %s41
      %p50 = scmp.eq.s32.totalorder %s21, 7
      %p51 = por %p49, %p50
      %p52 = scmp.ne.s32.totalorder %s41, %s42
      %p53 = scmp.eq.s32.totalorder %s21, 0
      %p54 = por %p52, %p53
      %p55 = scmp.ne.s32.totalorder %s41, %s42
      %p56 = scmp.eq.s32.totalorder %s22, 7
      %p57 = por %p55, %p56
      %p59 = scmp.ne.s32.totalorder %s42, %s58
      %p60 = scmp.eq.s32.totalorder %s22, 0
      %p61 = por %p59, %p60
      %s62 = ssub.s32 %s24, %s31
      %p63 = scmp.eq.s32.totalorder %s62, 0
      %s65 = sadd.s32 %s64, 1
      %s66 = scalar_select %p63, %s64, %s65
      %p69 = pneg %p63
      %p70 = scmp.eq.s32.totalorder %s16, 7
      %p71 = por %p69, %p70
      %p72 = scmp.ne.s32.totalorder %s64, %s67
      %p73 = scmp.eq.s32.totalorder %s16, 0
      %p74 = por %p72, %p73
      %p75 = scmp.ne.s32.totalorder %s64, %s67
      %p76 = scmp.eq.s32.totalorder %s21, 7
      %p77 = por %p75, %p76
      %p78 = scmp.ne.s32.totalorder %s67, %s68
      %p79 = scmp.eq.s32.totalorder %s21, 0
      %p80 = por %p78, %p79
      %p81 = scmp.ne.s32.totalorder %s67, %s68
      %p82 = scmp.eq.s32.totalorder %s22, 7
      %p83 = por %p81, %p82
      %p85 = scmp.ne.s32.totalorder %s68, %s84
      %p86 = scmp.eq.s32.totalorder %s22, 0
      %p87 = por %p85, %p86
      %s88 = ssub.s32 %s24, %s31
      %p89 = scmp.eq.s32.totalorder %s88, 0
      %s91 = sadd.s32 %s90, 1
      %s92 = scalar_select %p89, %s90, %s91
      %p95 = pneg %p89
      %p96 = scmp.eq.s32.totalorder %s16, 7
      %p97 = por %p95, %p96
      %p98 = scmp.ne.s32.totalorder %s90, %s93
      %p99 = scmp.eq.s32.totalorder %s16, 0
      %p100 = por %p98, %p99
      %p101 = scmp.ne.s32.totalorder %s90, %s93
      %p102 = scmp.eq.s32.totalorder %s21, 7
      %p103 = por %p101, %p102
      %p104 = scmp.ne.s32.totalorder %s93, %s94
      %p105 = scmp.eq.s32.totalorder %s21, 0
      %p106 = por %p104, %p105
      %p107 = scmp.ne.s32.totalorder %s93, %s94
      %p108 = scmp.eq.s32.totalorder %s22, 7
      %p109 = por %p107, %p108
      %p111 = scmp.ne.s32.totalorder %s94, %s110
      %p112 = scmp.eq.s32.totalorder %s22, 0
      %p113 = por %p111, %p112
      %s114 = ssub.s32 %s23, %s35
      %p115 = scmp.eq.s32.totalorder %s114, 0
      %s117 = sadd.s32 %s116, 1
      %s118 = scalar_select %p115, %s116, %s117
      %p121 = pneg %p115
      %p122 = scmp.eq.s32.totalorder %s16, 7
      %p123 = por %p121, %p122
      %p124 = scmp.ne.s32.totalorder %s116, %s119
      %p125 = scmp.eq.s32.totalorder %s16, 0
      %p126 = por %p124, %p125
      %p127 = scmp.ne.s32.totalorder %s116, %s119
      %p128 = scmp.eq.s32.totalorder %s21, 7
      %p129 = por %p127, %p128
      %p130 = scmp.ne.s32.totalorder %s119, %s120
      %p131 = scmp.eq.s32.totalorder %s21, 0
      %p132 = por %p130, %p131
      %p133 = scmp.ne.s32.totalorder %s119, %s120
      %p134 = scmp.eq.s32.totalorder %s22, 7
      %p135 = por %p133, %p134
      %p137 = scmp.ne.s32.totalorder %s120, %s136
      %p138 = scmp.eq.s32.totalorder %s22, 0
      %p139 = por %p137, %p138
      %s140 = ssub.s32 %s23, %s35
      %p141 = scmp.eq.s32.totalorder %s140, 0
      %s143 = sadd.s32 %s142, 1
      %s144 = scalar_select %p141, %s142, %s143
      %p147 = pneg %p141
      %p148 = scmp.eq.s32.totalorder %s16, 7
      %p149 = por %p147, %p148
      %p150 = scmp.ne.s32.totalorder %s142, %s145
      %p151 = scmp.eq.s32.totalorder %s16, 0
      %p152 = por %p150, %p151
      %p153 = scmp.ne.s32.totalorder %s142, %s145
      %p154 = scmp.eq.s32.totalorder %s21, 7
      %p155 = por %p153, %p154
      %p156 = scmp.ne.s32.totalorder %s145, %s146
      %p157 = scmp.eq.s32.totalorder %s21, 0
      %p158 = por %p156, %p157
      %p159 = scmp.ne.s32.totalorder %s145, %s146
      %p160 = scmp.eq.s32.totalorder %s22, 7
      %p161 = por %p159, %p160
      %p163 = scmp.ne.s32.totalorder %s146, %s162
      %p164 = scmp.eq.s32.totalorder %s22, 0
      %p165 = por %p163, %p164
      %s166 = ssub.s32 %s23, %s35
      %s167 = ssub.s32 %s24, %s31
      %s168 = sor.u32 %s166, %s167
      %p169 = scmp.eq.s32.totalorder %s168, 0
      %s171 = sadd.s32 %s170, 1
      %s172 = scalar_select %p169, %s170, %s171
      %p175 = pneg %p169
      %p176 = scmp.eq.s32.totalorder %s16, 7
      %p177 = por %p175, %p176
      %p178 = scmp.ne.s32.totalorder %s170, %s173
      %p179 = scmp.eq.s32.totalorder %s16, 0
      %p180 = por %p178, %p179
      %p181 = scmp.ne.s32.totalorder %s170, %s173
      %p182 = scmp.eq.s32.totalorder %s21, 7
      %p183 = por %p181, %p182
      %p184 = scmp.ne.s32.totalorder %s173, %s174
      %p185 = scmp.eq.s32.totalorder %s21, 0
      %p186 = por %p184, %p185
      %p187 = scmp.ne.s32.totalorder %s173, %s174
      %p188 = scmp.eq.s32.totalorder %s22, 7
      %p189 = por %p187, %p188
      %p191 = scmp.ne.s32.totalorder %s174, %s190
      %p192 = scmp.eq.s32.totalorder %s22, 0
      %p193 = por %p191, %p192
      %s194 = ssub.s32 %s23, %s35
      %p195 = scmp.eq.s32.totalorder %s194, 0
      %s197 = sadd.s32 %s196, 1
      %s198 = scalar_select %p195, %s196, %s197
      %p201 = pneg %p195
      %p202 = scmp.eq.s32.totalorder %s16, 7
      %p203 = por %p201, %p202
      %p204 = scmp.ne.s32.totalorder %s196, %s199
      %p205 = scmp.eq.s32.totalorder %s16, 0
      %p206 = por %p204, %p205
      %p207 = scmp.ne.s32.totalorder %s196, %s199
      %p208 = scmp.eq.s32.totalorder %s21, 7
      %p209 = por %p207, %p208
      %p210 = scmp.ne.s32.totalorder %s199, %s200
      %p211 = scmp.eq.s32.totalorder %s21, 0
      %p212 = por %p210, %p211
      %p213 = scmp.ne.s32.totalorder %s199, %s200
      %p214 = scmp.eq.s32.totalorder %s22, 7
      %p215 = por %p213, %p214
      %p217 = scmp.ne.s32.totalorder %s200, %s216
      %p218 = scmp.eq.s32.totalorder %s22, 0
      %p219 = por %p217, %p218
      %p220 = scmp.le.s32.totalorder 1, %s16
      %p221 = scmp.lt.s32.totalorder %s16, 9
      %p222 = pnand %p220, %p221
      %p223 = pneg %p222
      // Predicated region
      $region9: #{crfiqa_loss.1} parent=5 // pred_check
        _
      $region10: #{crfiqa_loss.1} parent=5 // pred_check_branch
        %225 = sbr.rel (%p222) target = $region12
      $region11: #{crfiqa_loss.1} parent=5 // pred_region
        %s226 = ssub.s32 %s16, 1
      $region12: #{crfiqa_loss.1} parent=5 // pred_fallthru
        _
      %p227 = scmp.lt.s32.totalorder %s16, 8
      // Predicated region
      $region13: #{crfiqa_loss.1} parent=5 // pred_check
        %p228 = pneg %p227
      $region14: #{crfiqa_loss.1} parent=5 // pred_check_branch
        %230 = sbr.rel (%p228) target = $region16
      $region15: #{crfiqa_loss.1} parent=5 // pred_region
        // Predicated region
        $region17: #{crfiqa_loss.1} parent=15 // pred_check
          %p231 = pneg %p48
        $region18: #{crfiqa_loss.1} parent=15 // pred_check_branch
          %233 = sbr.rel (%p231) target = $region20
        $region19: #{crfiqa_loss.1} parent=15 // pred_region
          %p234 = scmp.lt.s32.totalorder %s23, 1
          %s235 = scalar_select %p234, %s23, 1
          %s236 = smul.addr %s235, 8
          %s237 = scalar_lea.vmem %s0, %s236
        $region20: #{crfiqa_loss.1} parent=15 // pred_fallthru
          _
        // Predicated region
        $region21: #{crfiqa_loss.1} parent=15 // pred_check
          %p238 = pneg %p74
        $region22: #{crfiqa_loss.1} parent=15 // pred_check_branch
          %240 = sbr.rel (%p238) target = $region24
        $region23: #{crfiqa_loss.1} parent=15 // pred_region
          %s241 = sand.u32 %s64, 1
          %s242 = sand.u32 %s64, 1
          %s243 = smul.addr %s242, 64
          %s244 = scalar_lea.vmem [#allocation7], %s243
          %s245 = smul.addr %s24, 4
          %s246 = scalar_lea.vmem %s1, %s245
          // Predicated region
          $region25: #{crfiqa_loss.1} parent=23 // pred_check
            _
          $region26: #{crfiqa_loss.1} parent=23 // pred_check_branch
            %248 = sbr.rel (0) target = $region28
          $region27: #{crfiqa_loss.1} parent=23 // pred_region
            // Predicated region
            $region29: #{crfiqa_loss.1} parent=27 // pred_check
              _
            $region30: #{crfiqa_loss.1} parent=27 // pred_check_branch
              %250 = sbr.rel target = $region32
            $region31: #{crfiqa_loss.1} parent=27 // pred_region
              // Predicated region
              $region44: #{crfiqa_loss.1} parent=31 // pred_check
                _
              $region45: #{crfiqa_loss.1} parent=31 // pred_check_branch
                %296 = sbr.rel (0) target = $region47
              $region46: #{crfiqa_loss.1} parent=31 // pred_region
                loop: start=0, step=1, limit=1
                $region48: #{crfiqa_loss.1} parent=46 // loop_pre_header
                  _
                $region49: #{crfiqa_loss.1} parent=46 // loop_header
                  %s298 = sphi 0, %s302
                  %p299 = scmp.ge.s32.totalorder %s298, 1
                  %s303 = sphi %s246, %s246
                  %s304 = sphi %s244, %s244
                $region50: #{crfiqa_loss.1} parent=46 // loop_header_branch
                  %301 = sbr.rel (%p299) target = $region54
                $region51: #{crfiqa_loss.1} parent=46 // loop_body
                  _
                $region52: #{crfiqa_loss.1} parent=46 // loop_footer
                  %s302 = sadd.s32 1, %s298
                $region53: #{crfiqa_loss.1} parent=46 // loop_footer_branch
                  %297 = sbr.rel target = $region49
                $region54: #{crfiqa_loss.1} parent=46 // loop_exit
                  _
                %s306 = ssub.s32 16, 1
                loop: start=0, step=1, limit=1
                $region55: #{crfiqa_loss.1} parent=46 // loop_pre_header
                  _
                $region56: #{crfiqa_loss.1} parent=46 // loop_header
                  %s308 = sphi 0, %s312
                  %p309 = scmp.ge.s32.totalorder %s308, 1
                  %s313 = sphi %s246, %s246
                  %s314 = sphi %s244, %s244
                $region57: #{crfiqa_loss.1} parent=46 // loop_header_branch
                  %311 = sbr.rel (%p309) target = $region61
                $region58: #{crfiqa_loss.1} parent=46 // loop_body
                  %v315 = vld [vmem:[%s313] sm:%s306]
                  %316 = vst [vmem:[%s314] sm:%s306] %v315
                  %v317 = vld [vmem:[%s313 + $0x10] sm:%s306]
                  %318 = vst [vmem:[%s314 + $0x4] sm:%s306] %v317
                  %v319 = vld [vmem:[%s313 + $0x20] sm:%s306]
                  %320 = vst [vmem:[%s314 + $0x8] sm:%s306] %v319
                  %v321 = vld [vmem:[%s313 + $0x30] sm:%s306]
                  %322 = vst [vmem:[%s314 + $0xc] sm:%s306] %v321
                  %v323 = vld [vmem:[%s313 + $0x40] sm:%s306]
                  %324 = vst [vmem:[%s314 + $0x10] sm:%s306] %v323
                  %v325 = vld [vmem:[%s313 + $0x50] sm:%s306]
                  %326 = vst [vmem:[%s314 + $0x14] sm:%s306] %v325
                  %v327 = vld [vmem:[%s313 + $0x60] sm:%s306]
                  %328 = vst [vmem:[%s314 + $0x18] sm:%s306] %v327
                  %v329 = vld [vmem:[%s313 + $0x70] sm:%s306]
                  %330 = vst [vmem:[%s314 + $0x1c] sm:%s306] %v329
                  %v331 = vld [vmem:[%s313 + $0x80] sm:%s306]
                  %332 = vst [vmem:[%s314 + $0x20] sm:%s306] %v331
                  %v333 = vld [vmem:[%s313 + $0x90] sm:%s306]
                  %334 = vst [vmem:[%s314 + $0x24] sm:%s306] %v333
                  %v335 = vld [vmem:[%s313 + $0xa0] sm:%s306]
                  %336 = vst [vmem:[%s314 + $0x28] sm:%s306] %v335
                  %v337 = vld [vmem:[%s313 + $0xb0] sm:%s306]
                  %338 = vst [vmem:[%s314 + $0x2c] sm:%s306] %v337
                  %v339 = vld [vmem:[%s313 + $0xc0] sm:%s306]
                  %340 = vst [vmem:[%s314 + $0x30] sm:%s306] %v339
                  %v341 = vld [vmem:[%s313 + $0xd0] sm:%s306]
                  %342 = vst [vmem:[%s314 + $0x34] sm:%s306] %v341
                  %v343 = vld [vmem:[%s313 + $0xe0] sm:%s306]
                  %344 = vst [vmem:[%s314 + $0x38] sm:%s306] %v343
                  %v345 = vld [vmem:[%s313 + $0xf0] sm:%s306]
                  %346 = vst [vmem:[%s314 + $0x3c] sm:%s306] %v345
                $region59: #{crfiqa_loss.1} parent=46 // loop_footer
                  %s312 = sadd.s32 1, %s308
                $region60: #{crfiqa_loss.1} parent=46 // loop_footer_branch
                  %307 = sbr.rel target = $region56
                $region61: #{crfiqa_loss.1} parent=46 // loop_exit
                  _
              $region47: #{crfiqa_loss.1} parent=31 // pred_fallthru
                _
            $region32: #{crfiqa_loss.1} parent=27 // pred_fallthru
              _
            // Predicated region
            $region33: #{crfiqa_loss.1} parent=27 // pred_check
              _
            $region34: #{crfiqa_loss.1} parent=27 // pred_check_branch
              %252 = sbr.rel (0) target = $region36
            $region35: #{crfiqa_loss.1} parent=27 // pred_region
              %s254 = ssub.s32 16, 1
              loop: start=0, step=1, limit=1
              $region37: #{crfiqa_loss.1} parent=35 // loop_pre_header
                _
              $region38: #{crfiqa_loss.1} parent=35 // loop_header
                %s256 = sphi 0, %s260
                %p257 = scmp.ge.s32.totalorder %s256, 1
                %s261 = sphi %s246, %s246
                %s262 = sphi %s244, %s244
              $region39: #{crfiqa_loss.1} parent=35 // loop_header_branch
                %259 = sbr.rel (%p257) target = $region43
              $region40: #{crfiqa_loss.1} parent=35 // loop_body
                %v263 = vld [vmem:[%s261] sm:%s254]
                %264 = vst [vmem:[%s262] sm:%s254] %v263
                %v265 = vld [vmem:[%s261 + $0x10] sm:%s254]
                %266 = vst [vmem:[%s262 + $0x4] sm:%s254] %v265
                %v267 = vld [vmem:[%s261 + $0x20] sm:%s254]
                %268 = vst [vmem:[%s262 + $0x8] sm:%s254] %v267
                %v269 = vld [vmem:[%s261 + $0x30] sm:%s254]
                %270 = vst [vmem:[%s262 + $0xc] sm:%s254] %v269
                %v271 = vld [vmem:[%s261 + $0x40] sm:%s254]
                %272 = vst [vmem:[%s262 + $0x10] sm:%s254] %v271
                %v273 = vld [vmem:[%s261 + $0x50] sm:%s254]
                %274 = vst [vmem:[%s262 + $0x14] sm:%s254] %v273
                %v275 = vld [vmem:[%s261 + $0x60] sm:%s254]
                %276 = vst [vmem:[%s262 + $0x18] sm:%s254] %v275
                %v277 = vld [vmem:[%s261 + $0x70] sm:%s254]
                %278 = vst [vmem:[%s262 + $0x1c] sm:%s254] %v277
                %v279 = vld [vmem:[%s261 + $0x80] sm:%s254]
                %280 = vst [vmem:[%s262 + $0x20] sm:%s254] %v279
                %v281 = vld [vmem:[%s261 + $0x90] sm:%s254]
                %282 = vst [vmem:[%s262 + $0x24] sm:%s254] %v281
                %v283 = vld [vmem:[%s261 + $0xa0] sm:%s254]
                %284 = vst [vmem:[%s262 + $0x28] sm:%s254] %v283
                %v285 = vld [vmem:[%s261 + $0xb0] sm:%s254]
                %286 = vst [vmem:[%s262 + $0x2c] sm:%s254] %v285
                %v287 = vld [vmem:[%s261 + $0xc0] sm:%s254]
                %288 = vst [vmem:[%s262 + $0x30] sm:%s254] %v287
                %v289 = vld [vmem:[%s261 + $0xd0] sm:%s254]
                %290 = vst [vmem:[%s262 + $0x34] sm:%s254] %v289
                %v291 = vld [vmem:[%s261 + $0xe0] sm:%s254]
                %292 = vst [vmem:[%s262 + $0x38] sm:%s254] %v291
                %v293 = vld [vmem:[%s261 + $0xf0] sm:%s254]
                %294 = vst [vmem:[%s262 + $0x3c] sm:%s254] %v293
              $region41: #{crfiqa_loss.1} parent=35 // loop_footer
                %s260 = sadd.s32 1, %s256
              $region42: #{crfiqa_loss.1} parent=35 // loop_footer_branch
                %255 = sbr.rel target = $region38
              $region43: #{crfiqa_loss.1} parent=35 // loop_exit
                _
            $region36: #{crfiqa_loss.1} parent=27 // pred_fallthru
              _
          $region28: #{crfiqa_loss.1} parent=23 // pred_fallthru
            _
          %347 = vnop
        $region24: #{crfiqa_loss.1} parent=15 // pred_fallthru
          _
        // Predicated region
        $region62: #{crfiqa_loss.1} parent=15 // pred_check
          %p348 = pneg %p100
        $region63: #{crfiqa_loss.1} parent=15 // pred_check_branch
          %350 = sbr.rel (%p348) target = $region65
        $region64: #{crfiqa_loss.1} parent=15 // pred_region
          %p351 = scmp.lt.s32.totalorder %s24, 3
          %s352 = scalar_select %p351, %s24, 3
          %s353 = scalar_lea.vmem %s2, %s352
        $region65: #{crfiqa_loss.1} parent=15 // pred_fallthru
          _
        // Predicated region
        $region66: #{crfiqa_loss.1} parent=15 // pred_check
          %p354 = pneg %p126
        $region67: #{crfiqa_loss.1} parent=15 // pred_check_branch
          %356 = sbr.rel (%p354) target = $region69
        $region68: #{crfiqa_loss.1} parent=15 // pred_region
          %p357 = scmp.lt.s32.totalorder %s23, 1
          %s358 = scalar_select %p357, %s23, 1
          %s359 = smul.addr %s358, 8
          %s360 = scalar_lea.vmem %s3, %s359
        $region69: #{crfiqa_loss.1} parent=15 // pred_fallthru
          _
        // Predicated region
        $region70: #{crfiqa_loss.1} parent=15 // pred_check
          %p361 = pneg %p152
        $region71: #{crfiqa_loss.1} parent=15 // pred_check_branch
          %363 = sbr.rel (%p361) target = $region73
        $region72: #{crfiqa_loss.1} parent=15 // pred_region
          %p364 = scmp.lt.s32.totalorder %s23, 1
          %s365 = scalar_select %p364, %s23, 1
          %s366 = smul.addr %s365, 8
          %s367 = scalar_lea.vmem %s4, %s366
        $region73: #{crfiqa_loss.1} parent=15 // pred_fallthru
          _
      $region16: #{crfiqa_loss.1} parent=5 // pred_fallthru
        _
      %p368 = scmp.le.s32.totalorder 1, %s16
      %p369 = scmp.lt.s32.totalorder %s16, 9
      %p370 = pnand %p368, %p369
      %p371 = pneg %p370
      // Predicated region
      $region74: #{crfiqa_loss.1} parent=5 // pred_check
        _
      $region75: #{crfiqa_loss.1} parent=5 // pred_check_branch
        %373 = sbr.rel (%p370) target = $region77
      $region76: #{crfiqa_loss.1} parent=5 // pred_region
        %s374 = ssub.s32 %s16, 1
        %s375 = sand.u32 %s67, 1
        %s376 = sand.u32 %s67, 1
        %s377 = smul.addr %s376, 64
        %s378 = scalar_lea.vmem [#allocation7], %s377
        // Predicated region
        $region78: #{crfiqa_loss.1} parent=76 // pred_check
          %p379 = pneg %p80
        $region79: #{crfiqa_loss.1} parent=76 // pred_check_branch
          %381 = sbr.rel (%p379) target = $region81
        $region80: #{crfiqa_loss.1} parent=76 // pred_region
          _
        $region81: #{crfiqa_loss.1} parent=76 // pred_fallthru
          _
        %p382 = scmp.lt.s32.totalorder %s25, 1
        %s383 = scalar_select %p382, %s25, 1
        %s384 = smul.addr %s383, 8
        %s385 = scalar_lea.vmem %s0, %s384
        %p386 = pneg %p54
        %p387 = pneg %p51
        %s388 = sand.u32 %s67, 1
        %s389 = sand.u32 %s67, 1
        %s390 = smul.addr %s389, 64
        %s391 = scalar_lea.vmem [#allocation7], %s390
        %p392 = pneg %p80
        %p393 = pneg %p77
        %p394 = scmp.lt.s32.totalorder %s26, 3
        %s395 = scalar_select %p394, %s26, 3
        %s396 = scalar_lea.vmem %s2, %s395
        %p397 = pneg %p106
        %p398 = pneg %p103
        %p399 = scmp.lt.s32.totalorder %s25, 1
        %s400 = scalar_select %p399, %s25, 1
        %s401 = smul.addr %s400, 8
        %s402 = scalar_lea.vmem %s3, %s401
        %p403 = pneg %p132
        %p404 = pneg %p129
        %p405 = scmp.lt.s32.totalorder %s25, 1
        %s406 = scalar_select %p405, %s25, 1
        %s407 = smul.addr %s406, 8
        %s408 = scalar_lea.vmem %s4, %s407
        %p409 = pneg %p158
        %p410 = pneg %p155
        %p411 = pneg %p186
        %p412 = pneg %p183
        %s413 = sand.u32 %s173, 1
        %s414 = scalar_lea.sflag [#allocation9], %s413
        %s415 = sand.u32 %s173, 1
        %s416 = smul.addr %s415, 8
        %s417 = scalar_lea.vmem [#allocation8], %s416
        %p418 = pneg %p212
        %p419 = pneg %p209
        %p420 = scmp.lt.s32.totalorder %s25, 1
        %s421 = scalar_select %p420, %s25, 1
        %s422 = smul.addr %s421, 8
        %s423 = scalar_lea.vmem %s6, %s422
        %p424 = scmp.lt.s32.totalorder %s25, 1
        %s425 = scalar_select %p424, %s25, 1
        %s426 = smul.addr %s425, 8
        %s427 = scalar_lea.vmem %s0, %s426
        %p428 = scmp.lt.s32.totalorder %s26, 3
        %s429 = scalar_select %p428, %s26, 3
        %s430 = scalar_lea.vmem %s2, %s429
        %p431 = scmp.lt.s32.totalorder %s25, 1
        %s432 = scalar_select %p431, %s25, 1
        %s433 = smul.addr %s432, 8
        %s434 = scalar_lea.vmem %s3, %s433
        %p435 = scmp.lt.s32.totalorder %s25, 1
        %s436 = scalar_select %p435, %s25, 1
        %s437 = smul.addr %s436, 8
        %s438 = scalar_lea.vmem %s4, %s437
        %p439 = scmp.lt.s32.totalorder %s25, 1
        %s440 = scalar_select %p439, %s25, 1
        %s441 = smul.addr %s440, 8
        %s442 = scalar_lea.vmem %s6, %s441
        %p443 = scmp.eq.s32.totalorder %s26, 0
        // Predicated region
        $region82: #{crfiqa_loss.1} parent=76 // pred_check
          %p444 = pneg %p443
        $region83: #{crfiqa_loss.1} parent=76 // pred_check_branch
          %446 = sbr.rel (%p444) target = $region85
        $region84: #{crfiqa_loss.1} parent=76 // pred_region
          %v447 = vld [vmem:[%s427] sm:$0xff]
          %v448 = vmul.f32 %v447, %v447
          %449 = vadd.xlane.f32.xlu0 %v448
          %v450 = vpop.xlane.xlu0 %449
          %v451 = vrsqrt.pop %v450
          %v452 = vmul.f32 %v451, %v450
          %v453 = vmul.f32 %v452, %v451
          %v454 = vmul.f32 0.5, %v453
          %v455 = vsub.f32 1.5, %v454
          %v456 = vmul.f32 %v451, %v455
          %vm457 = vweird.f32 %v450
          %vm458 = vweird.f32 %v451
          %vm459 = vmor %vm457, %vm458
          %v460 = vsel %vm459, %v451, %v456
          %v461 = vmul.f32 %v447, %v460
          %v462 = vpack.c.bf16 %v461, %v461
          %463 = vst [vmem:[#allocation2] sm:$0xf] %v462
          %vm464 = vcmask 7168
          %465 = vst.msk [vmem:[#allocation3] sm:$0xff] %vm464, -inf
          %466 = vst.msk [vmem:[#allocation4] sm:$0xff] %vm464, 0.0
          %467 = vst.msk [vmem:[#allocation5] sm:$0xff] %vm464, 0.0
          %468 = vst.msk [vmem:[#allocation6] sm:$0xff] %vm464, -inf
        $region85: #{crfiqa_loss.1} parent=76 // pred_fallthru
          _
        %v469 = vld [vmem:[#allocation2] sm:$0xf]
        %v470 = vld [vmem:[%s378] sm:$0xf]
        %v471 = vld [vmem:[%s378 + $0x4] sm:$0xf]
        %v472 = vld [vmem:[%s378 + $0x8] sm:$0xf]
        %v473 = vld [vmem:[%s378 + $0xc] sm:$0xf]
        %v474 = vld [vmem:[%s378 + $0x10] sm:$0xf]
        %v475 = vld [vmem:[%s378 + $0x14] sm:$0xf]
        %v476 = vld [vmem:[%s378 + $0x18] sm:$0xf]
        %v477 = vld [vmem:[%s378 + $0x1c] sm:$0xf]
        %v478 = vld [vmem:[%s378 + $0x20] sm:$0xf]
        %v479 = vld [vmem:[%s378 + $0x24] sm:$0xf]
        %v480 = vld [vmem:[%s378 + $0x28] sm:$0xf]
        %v481 = vld [vmem:[%s378 + $0x2c] sm:$0xf]
        %v482 = vld [vmem:[%s378 + $0x30] sm:$0xf]
        %v483 = vld [vmem:[%s378 + $0x34] sm:$0xf]
        %v484 = vld [vmem:[%s378 + $0x38] sm:$0xf]
        %v485 = vld [vmem:[%s378 + $0x3c] sm:$0xf]
        %v502 = vunpack.c.l.b16 %v470
        %v503 = vunpack.c.l.b16 %v471
        %v504 = vunpack.c.l.b16 %v472
        %v505 = vunpack.c.l.b16 %v473
        %v506 = vunpack.c.l.b16 %v474
        %v507 = vunpack.c.l.b16 %v475
        %v508 = vunpack.c.l.b16 %v476
        %v509 = vunpack.c.l.b16 %v477
        %v510 = vunpack.c.l.b16 %v478
        %v511 = vunpack.c.l.b16 %v479
        %v512 = vunpack.c.l.b16 %v480
        %v513 = vunpack.c.l.b16 %v481
        %v514 = vunpack.c.l.b16 %v482
        %v515 = vunpack.c.l.b16 %v483
        %v516 = vunpack.c.l.b16 %v484
        %v517 = vunpack.c.l.b16 %v485
        %v518 = vpack.c.b16 %v503, %v502
        %v519 = vpack.c.b16 %v505, %v504
        %v520 = vpack.c.b16 %v507, %v506
        %v521 = vpack.c.b16 %v509, %v508
        %v522 = vpack.c.b16 %v511, %v510
        %v523 = vpack.c.b16 %v513, %v512
        %v524 = vpack.c.b16 %v515, %v514
        %v525 = vpack.c.b16 %v517, %v516
        %534 = vmatpush.bf16.msra.mxu0 %v525
        %535 = vmatpush.bf16.msra.mxu0 %v524
        %536 = vmatpush.bf16.msra.mxu0 %v523
        %537 = vmatpush.bf16.msra.mxu0 %v522
        %538 = vmatpush.bf16.msra.mxu0 %v521
        %539 = vmatpush.bf16.msra.mxu0 %v520
        %540 = vmatpush.bf16.msra.mxu0 %v519
        %541 = vmatpush.bf16.msra.mxu0 %v518
        %542 = vmatmul.bf16.gmra.mxu0 %v469
        %v543 = vpop.f32.mrf.mxu0
        %v544 = vadd.f32 0.0, %v543
        %v545 = vpop.f32.mrf.mxu0
        %546 = vdwg.mxu0
        %v547 = vld [vmem:[%s430] sm:$0x1]
        %v549 = vperm.slane %v547, 0
        %v551 = vmul.f32 %v544, %v549
        %v552 = vmax.f32 %v551, -1.0
        %v553 = vmin.f32 %v552, 1.0
        %v554 = vld [vmem:[%s434] sm:$0xff]
        %v555 = vlaneseq
        %v556 = vand.u32 %v555, 127
        %s557 = smul.u32 %s26, 128
        %v558 = vstv %s557
        %v559 = vadd.s32 %v556, %v558
        %560 = vset.pattern.permute.xlu0 0
        %561 = vperm.xlu0 %560, %v554
        %v562 = vpop.permute.xlu0 %561
        %vm563 = vcmp.eq.s32.totalorder %v559, %v562
        %v564 = vsel %vm563, %v553, 0.0
        %565 = vadd.xlane.f32.xlu0 %v564
        %v566 = vpop.xlane.xlu0 %565
        %v567 = vld [vmem:[#allocation5] sm:$0xff]
        %v568 = vadd.f32 %v567, %v566
        %vm569 = vcmask 7168
        %570 = vst.msk [vmem:[#allocation5] sm:$0xff] %vm569, %v568
        %v571 = vld [vmem:[#allocation6] sm:$0xff]
        %v572 = vsel %vm563, -1e-12, %v553
        %573 = vmax.xlane.f32.xlu0 %v572
        %v574 = vpop.xlane.xlu0 %573
        %v575 = vmax.f32 %v571, %v574
        %576 = vst.msk [vmem:[#allocation6] sm:$0xff] %vm569, %v575
        %v577 = vmul.f32 %v566, 0.87758255
        %v578 = vmul.f32 %v566, %v566
        %v579 = vsub.f32 1.0, %v578
        %v580 = vmax.f32 %v579, 0.0
        %v581 = vrsqrt.pop %v580
        %v582 = vmul.f32 %v581, %v580
        %v583 = vmul.f32 %v582, %v581
        %v584 = vmul.f32 0.5, %v583
        %v585 = vsub.f32 1.5, %v584
        %v586 = vmul.f32 %v581, %v585
        %v587 = vmul.f32 %v580, %v586
        %vm588 = vcmp.eq.f32.partialorder %v580, inf
        %v589 = vsel %vm588, %v580, %v587
        %vm590 = vcmp.eq.f32.partialorder %v580, 0.0
        %v591 = vand.u32 %v580, 2147483648
        %v592 = vsel %vm590, %v591, %v589
        %v593 = vmul.f32 %v592, 0.47942555
        %v594 = vsub.f32 %v577, %v593
        %v595 = vmul.f32 %v594, 64.0
        %v596 = vmul.f32 %v553, 64.0
        %v597 = vsel %vm563, %v595, %v596
        %598 = vst [vmem:[%s417] sm:$0xff] %v597
        %v599 = vld [vmem:[#allocation3] sm:$0xff]
        %600 = vmax.xlane.f32.xlu0 %v597
        %v601 = vpop.xlane.xlu0 %600
        %v602 = vmax.f32 %v599, %v601
        %v603 = vld [vmem:[#allocation4] sm:$0xff]
        %v604 = vsub.f32 %v599, %v602
        %v605 = vmul.f32 %v604, 1.442695
        %v606 = vpow.pop %v605
        %v607 = vmul.f32 %v603, %v606
        %609 = vset.pattern.permute.xlu0 0
        %610 = vperm.xlu0 %609, %v602
        %v611 = vpop.permute.xlu0 %610
        %v613 = vsub.f32 %v597, %v611
        %v614 = vmul.f32 %v613, 1.442695
        %v615 = vpow.pop %v614
        %616 = vadd.xlane.f32.xlu0 %v615
        %v617 = vpop.xlane.xlu0 %616
        %v618 = vadd.f32 %v607, %v617
        %619 = vst.msk [vmem:[#allocation4] sm:$0xff] %vm569, %v618
        %620 = vst.msk [vmem:[#allocation3] sm:$0xff] %vm569, %v602
        %p621 = scmp.eq.s32.totalorder %s26, 3
        // Predicated region
        $region86: #{crfiqa_loss.1} parent=76 // pred_check
          %p622 = pneg %p621
        $region87: #{crfiqa_loss.1} parent=76 // pred_check_branch
          %624 = sbr.rel (%p622) target = $region89
        $region88: #{crfiqa_loss.1} parent=76 // pred_region
          %v625 = vld [vmem:[#allocation5] sm:$0xff]
          %v626 = vld [vmem:[#allocation6] sm:$0xff]
          %v627 = vmul.f32 %v625, 0.87758255
          %v628 = vmul.f32 %v625, %v625
          %v629 = vsub.f32 1.0, %v628
          %v630 = vmax.f32 %v629, 0.0
          %v631 = vrsqrt.pop %v630
          %v632 = vmul.f32 %v631, %v630
          %v633 = vmul.f32 %v632, %v631
          %v634 = vmul.f32 0.5, %v633
          %v635 = vsub.f32 1.5, %v634
          %v636 = vmul.f32 %v631, %v635
          %v637 = vmul.f32 %v630, %v636
          %vm638 = vcmp.eq.f32.partialorder %v630, inf
          %v639 = vsel %vm638, %v630, %v637
          %vm640 = vcmp.eq.f32.partialorder %v630, 0.0
          %v641 = vand.u32 %v630, 2147483648
          %v642 = vsel %vm640, %v641, %v639
          %v643 = vmul.f32 %v642, 0.47942555
          %v644 = vsub.f32 %v627, %v643
          %v645 = vmul.f32 %v644, 64.0
          %v646 = vld [vmem:[#allocation3] sm:$0xff]
          %v647 = vld [vmem:[#allocation4] sm:$0xff]
          %v648 = vlog2.pop %v647
          %v649 = vmul.f32 %v648, 0.6931472
          %v650 = vadd.f32 %v646, %v649
          %v651 = vsub.f32 %v650, %v645
          %v652 = vrcp.pop %v626
          %v653 = vmul.f32 %v626, %v652
          %v654 = vsub.f32 1.0, %v653
          %v655 = vmul.f32 %v652, %v654
          %v656 = vadd.f32 %v652, %v655
          %vm657 = vweird.f32 %v626
          %vm658 = vweird.f32 %v652
          %vm659 = vmor %vm657, %vm658
          %v660 = vsel %vm659, %v652, %v656
          %v661 = vand.u32 2147483647, %v626
          %vm662 = vcmp.eq.f32.partialorder %v661, 8.507059e+37
          %v663 = vand.u32 %v626, 2147483648
          %v664 = vor.u32 1.1754944e-38, %v663
          %v665 = vsel %vm662, %v664, %v660
          %v666 = vmul.f32 %v625, %v665
          %v667 = vld [vmem:[%s438] sm:$0xff]
          %v668 = vsub.f32 %v666, %v667
          %v669 = vand.u32 2147483647, %v668
          %vm670 = vcmp.lt.f32.partialorder %v669, 0.5
          %v671 = vmul.f32 %v668, %v668
          %v672 = vsub.f32 %v669, 0.25
          %v673 = vsel %vm670, %v671, %v672
          %v674 = vmul.f32 %v673, 10.0
          %v675 = vadd.f32 %v651, %v674
          %676 = vst.msk [vmem:[%s442] sm:$0xff] %vm569, %v675
        $region89: #{crfiqa_loss.1} parent=76 // pred_fallthru
          _
        %s677 = sand.u32 %s173, 1
        %s678 = scalar_lea.sflag [#allocation9], %s677
        %s679 = sand.u32 %s173, 1
        %s680 = smul.addr %s679, 8
        %s681 = scalar_lea.vmem [#allocation8], %s680
        %p682 = scmp.lt.s32.totalorder %s25, 1
        %s683 = scalar_select %p682, %s25, 1
        %s684 = smul.addr %s683, 8
        %s685 = scalar_lea.vmem %s6, %s684
        // Predicated region
        $region90: #{crfiqa_loss.1} parent=76 // pred_check
          %p686 = pneg %p183
        $region91: #{crfiqa_loss.1} parent=76 // pred_check_branch
          %688 = sbr.rel (%p686) target = $region93
        $region92: #{crfiqa_loss.1} parent=76 // pred_region
          %690 = vsyncadd %s678, 0
          %s691 = smul.addr %s25, 4
          %s692 = sadd.s32 %s26, %s691
          %s693 = smul.addr %s692, 8
          %s694 = scalar_lea.hbm %s5, %s693
          %s696 = sshll.u32 %s681, 4
          %s697 = int_to_ptr.vmem [resolvable:$true] %s696
          %s698 = sshll.u32 %s694, 4
          %s699 = int_to_ptr.hbm [resolvable:$true] %s698
          %701 = dma.vmem_to_hbm [thread:$0]  %s697, 128, %s699, %s678
        $region93: #{crfiqa_loss.1} parent=76 // pred_fallthru
          _
        // Predicated region
        $region94: #{crfiqa_loss.1} parent=76 // pred_check
          %p702 = pneg %p209
        $region95: #{crfiqa_loss.1} parent=76 // pred_check_branch
          %704 = sbr.rel (%p702) target = $region97
        $region96: #{crfiqa_loss.1} parent=76 // pred_region
          _
        $region97: #{crfiqa_loss.1} parent=76 // pred_fallthru
          _
      $region77: #{crfiqa_loss.1} parent=5 // pred_fallthru
        _
      %p705 = scmp.le.s32.totalorder 2, %s16
      // Predicated region
      $region98: #{crfiqa_loss.1} parent=5 // pred_check
        %p706 = pneg %p705
      $region99: #{crfiqa_loss.1} parent=5 // pred_check_branch
        %708 = sbr.rel (%p706) target = $region101
      $region100: #{crfiqa_loss.1} parent=5 // pred_region
        %s709 = ssub.s32 %s16, 2
        // Predicated region
        $region102: #{crfiqa_loss.1} parent=100 // pred_check
          %p710 = pneg %p189
        $region103: #{crfiqa_loss.1} parent=100 // pred_check_branch
          %712 = sbr.rel (%p710) target = $region105
        $region104: #{crfiqa_loss.1} parent=100 // pred_region
          %s713 = sand.u32 %s174, 1
          %s714 = scalar_lea.sflag [#allocation9], %s713
          %s715 = sand.u32 %s174, 1
          %s716 = smul.addr %s715, 8
          %s717 = scalar_lea.vmem [#allocation8], %s716
          %719 = dma.done %s714, 128
        $region105: #{crfiqa_loss.1} parent=100 // pred_fallthru
          _
        // Predicated region
        $region106: #{crfiqa_loss.1} parent=100 // pred_check
          %p720 = pneg %p215
        $region107: #{crfiqa_loss.1} parent=100 // pred_check_branch
          %722 = sbr.rel (%p720) target = $region109
        $region108: #{crfiqa_loss.1} parent=100 // pred_region
          %p723 = scmp.lt.s32.totalorder %s27, 1
          %s724 = scalar_select %p723, %s27, 1
          %s725 = smul.addr %s724, 8
          %s726 = scalar_lea.vmem %s6, %s725
        $region109: #{crfiqa_loss.1} parent=100 // pred_fallthru
          _
      $region101: #{crfiqa_loss.1} parent=5 // pred_fallthru
        _
    $region6: #{crfiqa_loss.1} parent=1 // loop_footer
      %s20 = sadd.s32 1, %s16
    $region7: #{crfiqa_loss.1} parent=1 // loop_footer_branch
      %15 = sbr.rel target = $region3
    $region8: #{crfiqa_loss.1} parent=1 // loop_exit
      _
    %727 = vsyncpa [#allocation9], 1
    %s728 = scalar_lea.sflag [#allocation9], 1
    %729 = vsyncpa %s728, 1

</llo_original>
